<compile_context>
chip_gen: v7x
topology: tpu7x:2x2x1
jax: 0.10.0
libtpu: 0.0.40
codegen_flags: <defaults>
</compile_context>

<pallas_src>
import functools

import jax
import jax.numpy as jnp
from jax import lax
from jax.experimental import pallas as pl
from jax.experimental.pallas import tpu as pltpu

BN_EPS = 1e-5
_LANE = 128
_SUBLANE = 8


def _round_up(x, m):
    return ((x + m - 1) // m) * m


def _cdiv(a, b):
    return (a + b - 1) // b


# --------------------------------------------------------------------------- #
# Kernel A: BN statistics pass (sequential over row tiles).
# --------------------------------------------------------------------------- #
def _stats_kernel(x_ref, w_ref, gamma_ref, beta_ref,     # inputs
                  scale_ref, shift_ref,                   # outputs (1, C_out_p)
                  sum_ref, sumsq_ref,                     # VMEM scratch
                  *, m_rows):
    # x_ref: (TM, C_in_p) bf16 strided/zero-padded input rows
    # w_ref: (C_in_p, C_out_p) bf16 fused [conv_1 | conv_2] weight (cat order)
    i = pl.program_id(0)

    @pl.when(i == 0)
    def _init():
        sum_ref[...] = jnp.zeros_like(sum_ref)
        sumsq_ref[...] = jnp.zeros_like(sumsq_ref)
        # Output blocks never change -> only written back once, after the last
        # tile has filled them; zero-init anyway so no garbage can ever leak.
        scale_ref[...] = jnp.zeros_like(scale_ref)
        shift_ref[...] = jnp.zeros_like(shift_ref)

    # ReLU + fused dual 1x1 conv as one bf16 MXU matmul with f32 accumulation.
    x = jnp.maximum(x_ref[...], 0)
    y = jnp.dot(x, w_ref[...], preferred_element_type=jnp.float32)

    sum_ref[...] += jnp.sum(y, axis=0, keepdims=True)
    sumsq_ref[...] += jnp.sum(y * y, axis=0, keepdims=True)

    @pl.when(i == pl.num_programs(0) - 1)
    def _finalize():
        m = jnp.float32(m_rows)                       # real row count (padding excluded)
        mean = sum_ref[...] / m
        # NOTE: sumsq/m - mean^2 in f32; fine for typical activation scales,
        # clamp guards the tiny negative values from rounding.
        var = jnp.maximum(sumsq_ref[...] / m - mean * mean, 0.0)
        inv_std = lax.rsqrt(var + BN_EPS)
        scale = gamma_ref[...] * inv_std
        scale_ref[...] = scale
        shift_ref[...] = beta_ref[...] - mean * scale


# --------------------------------------------------------------------------- #
# Kernel B: normalize pass ("parallel" over row tiles -> both TCs on v7x).
# --------------------------------------------------------------------------- #
def _normalize_kernel(x_ref, w_ref, scale_ref, shift_ref, o_ref):
    x = jnp.maximum(x_ref[...], 0)
    y = jnp.dot(x, w_ref[...], preferred_element_type=jnp.float32)
    # Single FMA per element with hoisted per-column factors.
    o_ref[...] = (y * scale_ref[...] + shift_ref[...]).astype(o_ref.dtype)


# --------------------------------------------------------------------------- #
# Wrapper
# --------------------------------------------------------------------------- #
def factorized_reduce(x, w1, w2, gamma, beta, *, tile_m=None, out_dtype=None):
    """x: (N, C_in, L) float32 (NCL, like PyTorch Conv1d).
       w1, w2: (C_out//2, C_in, 1) conv weights.  gamma, beta: (C_out,)."""
    N, C_in, L = x.shape
    C_half = w1.shape[0]
    C_out = 2 * C_half
    L_out = (L - 1) // 2 + 1  # kernel=1, stride=2, pad=0
    M = N * L_out
    out_dtype = x.dtype if out_dtype is None else out_dtype

    C_in_p = _round_up(C_in, _LANE)
    C_out_p = _round_up(C_out, _LANE)

    # --- Generation-aware VMEM budgets (v7x: 64 MiB/TC, v5e/v6e: 128 MiB). ---
    try:
        vmem_cap = int(getattr(pltpu.get_tpu_info(), "vmem_capacity_bytes",
                               64 * 1024 * 1024))
    except Exception:  # pragma: no cover - interpret / unknown backends
        vmem_cap = 64 * 1024 * 1024
    big_vmem = vmem_cap >= 96 * 1024 * 1024
    budget = (32 if big_vmem else 14) * 1024 * 1024
    tile_m_cap = 4096 if big_vmem else 2048
    vmem_limit_cap = (100 if big_vmem else 40) * 1024 * 1024

    # --- Row-tile selection: biggest tile fitting the budget, then re-balanced
    # so the padded row count barely exceeds M (no near-empty final tile). ---
    if tile_m is None:
        # bf16 x double-buffer + out double-buffer (<=f32) + f32 y temporary.
        bytes_per_row = 2 * 2 * C_in_p + (2 * 4 + 4) * C_out_p
        tile_m = (budget // bytes_per_row) // _SUBLANE * _SUBLANE
        tile_m = max(_SUBLANE, min(tile_m_cap, tile_m))
    tile_m = max(_SUBLANE, _round_up(tile_m, _SUBLANE))
    M8 = _round_up(M, _SUBLANE)
    n_tiles = max(1, _cdiv(M8, tile_m))
    tile_m = _round_up(_cdiv(M8, n_tiles), _SUBLANE)
    M_pad = n_tiles * tile_m

    # --- XLA glue: stride-2 sample + NCL -> (rows, channels), cast to bf16 and
    # zero-pad to aligned shapes.  Zero rows/cols are exact no-ops for the
    # matmul and the BN sums.  (See TODO at top: fold into the kernel.) ---
    x_s = jnp.transpose(x[:, :, ::2], (0, 2, 1)).reshape(M, C_in)
    x_s = jnp.pad(x_s.astype(jnp.bfloat16), ((0, M_pad - M), (0, C_in_p - C_in)))

    # Fused weight: columns [0:C_half] = conv_1, [C_half:C_out] = conv_2 (cat order).
    w = jnp.zeros((C_in_p, C_out_p), jnp.bfloat16)
    w = w.at[:C_in, :C_half].set(w1[:, :, 0].T.astype(jnp.bfloat16))
    w = w.at[:C_in, C_half:C_out].set(w2[:, :, 0].T.astype(jnp.bfloat16))

    g = jnp.ones((1, C_out_p), jnp.float32).at[0, :C_out].set(gamma.astype(jnp.float32))
    b = jnp.zeros((1, C_out_p), jnp.float32).at[0, :C_out].set(beta.astype(jnp.float32))

    # VMEM estimate (covers the bigger of the two calls) with headroom.
    vmem_est = (2 * 2 * tile_m * C_in_p        # x double buffer (bf16)
                + 2 * 4 * tile_m * C_out_p     # out double buffer (<= f32)
                + 4 * tile_m * C_out_p         # f32 y temporary
                + 2 * C_in_p * C_out_p         # fused weight (bf16)
                + 64 * C_out_p)                # BN vectors / scratch
    vmem_limit = int(min(max(int(vmem_est * 1.5) + (2 << 20), 16 * 1024 * 1024),
                         vmem_limit_cap))

    x_spec = pl.BlockSpec((tile_m, C_in_p), lambda i: (i, 0))
    w_spec = pl.BlockSpec((C_in_p, C_out_p), lambda i: (0, 0))
    vec_spec = pl.BlockSpec((1, C_out_p), lambda i: (0, 0))

    # ---- Call A: BN statistics (sequential; shared accumulators in scratch). ----
    scale, shift = pl.pallas_call(
        functools.partial(_stats_kernel, m_rows=M),
        out_shape=(jax.ShapeDtypeStruct((1, C_out_p), jnp.float32),
                   jax.ShapeDtypeStruct((1, C_out_p), jnp.float32)),
        grid_spec=pltpu.PrefetchScalarGridSpec(
            num_scalar_prefetch=0,
            grid=(n_tiles,),
            in_specs=[x_spec, w_spec, vec_spec, vec_spec],
            out_specs=[vec_spec, vec_spec],
            scratch_shapes=[pltpu.VMEM((1, C_out_p), jnp.float32),   # column sum
                            pltpu.VMEM((1, C_out_p), jnp.float32)],  # column sumsq
        ),
        compiler_params=pltpu.CompilerParams(
            dimension_semantics=("arbitrary",),   # shared BN accumulators -> sequential
            vmem_limit_bytes=vmem_limit,
        ),
    )(x_s, w, g, b)

    # ---- Call B: normalize (embarrassingly parallel over row tiles). ----
    out_flat = pl.pallas_call(
        _normalize_kernel,
        out_shape=jax.ShapeDtypeStruct((M_pad, C_out_p), out_dtype),
        grid_spec=pltpu.PrefetchScalarGridSpec(
            num_scalar_prefetch=0,
            grid=(n_tiles,),
            in_specs=[x_spec, w_spec, vec_spec, vec_spec],
            out_specs=pl.BlockSpec((tile_m, C_out_p), lambda i: (i, 0)),
        ),
        compiler_params=pltpu.CompilerParams(
            dimension_semantics=("parallel",),    # megacore-shardable on v7x
            vmem_limit_bytes=vmem_limit,
        ),
    )(x_s, w, scale, shift)

    # Slice padding away, back to PyTorch NCL layout.
    out = out_flat[:M, :C_out].reshape(N, L_out, C_out)
    return jnp.transpose(out, (0, 2, 1))


# --------------------------------------------------------------------------- #
# Reference
# --------------------------------------------------------------------------- #
def _reference(x, w1, w2, gamma, beta, *, match_bf16=False):
    """Pure-JAX reference mirroring the PyTorch forward (training-mode BN).
    match_bf16=True rounds the conv operands to bf16 (like the kernel's MXU
    path) so the comparison isolates structural correctness."""
    xr = jnp.maximum(x, 0.0)
    xs = xr[:, :, ::2]  # (N, C_in, L_out)
    if match_bf16:
        xs = xs.astype(jnp.bfloat16)
        w1m = w1[:, :, 0].astype(jnp.bfloat16)
        w2m = w2[:, :, 0].astype(jnp.bfloat16)
    else:
        w1m, w2m = w1[:, :, 0], w2[:, :, 0]
    y1 = jnp.einsum("oc,ncl->nol", w1m, xs, preferred_element_type=jnp.float32)
    y2 = jnp.einsum("oc,ncl->nol", w2m, xs, preferred_element_type=jnp.float32)
    y = jnp.concatenate([y1, y2], axis=1)  # (N, C_out, L_out)
    mean = jnp.mean(y, axis=(0, 2), keepdims=True)
    var = jnp.mean((y - mean) ** 2, axis=(0, 2), keepdims=True)
    y_hat = (y - mean) * lax.rsqrt(var + BN_EPS)
    return y_hat * gamma[None, :, None] + beta[None, :, None]


if __name__ == "__main__":
    # --- Test 1: module-consistent tiny shapes (single tile, padded channels). ---
    N, C_in, C_out, L = 2, 4, 4, 16
    C_half = C_out // 2
    key = jax.random.PRNGKey(0)
    kx, k1, k2 = jax.random.split(key, 3)
    x = jax.random.normal(kx, (N, C_in, L), dtype=jnp.float32)
    w1 = jax.random.normal(k1, (C_half, C_in, 1), dtype=jnp.float32) * 0.1
    w2 = jax.random.normal(k2, (C_half, C_in, 1), dtype=jnp.float32) * 0.1
    gamma = jnp.ones((C_out,), dtype=jnp.float32)
    beta = jnp.zeros((C_out,), dtype=jnp.float32)

    out = factorized_reduce(x, w1, w2, gamma, beta)
    jax.block_until_ready(out)
    assert out.shape == (N, C_out, L // 2), out.shape
    # Tight check vs. bf16-operand reference (same MXU operand rounding).
    ref_t = _reference(x, w1, w2, gamma, beta, match_bf16=True)
    assert jnp.allclose(out, ref_t, atol=1e-3, rtol=1e-3), "mismatch vs bf16 reference (test 1)"
    # Loose check vs. full-f32 PyTorch-equivalent reference (bf16 MXU rounding).
    ref_f = _reference(x, w1, w2, gamma, beta)
    assert jnp.allclose(out, ref_f, atol=3e-2, rtol=3e-2), "mismatch vs f32 reference (test 1)"

    # --- Test 2: multi-tile BN accumulation + row/channel padding + affine + parallel normalize. ---
    N2, C_in2, C_out2, L2 = 3, 24, 40, 40   # M = 3*20 = 60 rows, tile_m=8 -> 8 tiles
    C_half2 = C_out2 // 2
    k3, k4, k5, k6, k7 = jax.random.split(jax.random.PRNGKey(0), 5)
    x2 = jax.random.normal(k3, (N2, C_in2, L2), dtype=jnp.float32)
    w12 = jax.random.normal(k4, (C_half2, C_in2, 1), dtype=jnp.float32) * 0.1
    w22 = jax.random.normal(k5, (C_half2, C_in2, 1), dtype=jnp.float32) * 0.1
    gamma2 = 1.0 + 0.1 * jax.random.normal(k6, (C_out2,), dtype=jnp.float32)
    beta2 = 0.1 * jax.random.normal(k7, (C_out2,), dtype=jnp.float32)

    out2 = factorized_reduce(x2, w12, w22, gamma2, beta2, tile_m=8)
    jax.block_until_ready(out2)
    ref2_t = _reference(x2, w12, w22, gamma2, beta2, match_bf16=True)
    assert out2.shape == ref2_t.shape, (out2.shape, ref2_t.shape)
    assert jnp.allclose(out2, ref2_t, atol=1e-3, rtol=1e-3), "mismatch vs bf16 reference (test 2)"
    ref2_f = _reference(x2, w12, w22, gamma2, beta2)
    assert jnp.allclose(out2, ref2_f, atol=3e-2, rtol=3e-2), "mismatch vs f32 reference (test 2)"

    print("KERNEL_OK")
</pallas_src>

<mosaic_0001>
module attributes {stable_mosaic.version = 11 : i64} {
  func.func @_stats_kernel(%arg0: i32, %arg1: memref<16x128xbf16, #tpu.memory_space<vmem>>, %arg2: memref<128x128xbf16, #tpu.memory_space<vmem>>, %arg3: memref<1x128xf32, #tpu.memory_space<vmem>>, %arg4: memref<1x128xf32, #tpu.memory_space<vmem>>, %arg5: memref<1x128xf32, #tpu.memory_space<vmem>>, %arg6: memref<1x128xf32, #tpu.memory_space<vmem>>, %arg7: memref<1x128xf32, #tpu.memory_space<vmem>>, %arg8: memref<1x128xf32, #tpu.memory_space<vmem>>) attributes {dimension_semantics = [#tpu.dimension_semantics<arbitrary>], iteration_bounds = array<i64: 1>, scalar_prefetch = 0 : i64, scratch_operands = 2 : i64, tpu.core_type = #tpu.core_type<tc>, window_params = [{transform_indices = @transform_0, window_bounds = array<i64: 16, 128>}, {pipeline_mode = #tpu.pipeline_mode<synchronous>, transform_indices = @transform_1, window_bounds = array<i64: 128, 128>}, {pipeline_mode = #tpu.pipeline_mode<synchronous>, transform_indices = @transform_2, window_bounds = array<i64: 1, 128>}, {pipeline_mode = #tpu.pipeline_mode<synchronous>, transform_indices = @transform_3, window_bounds = array<i64: 1, 128>}, {pipeline_mode = #tpu.pipeline_mode<synchronous>, transform_indices = @transform_4, window_bounds = array<i64: 1, 128>}, {pipeline_mode = #tpu.pipeline_mode<synchronous>, transform_indices = @transform_5, window_bounds = array<i64: 1, 128>}]} {
    %c0_i32 = arith.constant 0 : i32
    %0 = arith.cmpi eq, %arg0, %c0_i32 : i32
    %1 = arith.extui %0 : i1 to i32
    %c0_i32_0 = arith.constant 0 : i32
    %2 = arith.cmpi ne, %1, %c0_i32_0 : i32
    scf.if %2 {
      %cst_17 = arith.constant 0.000000e+00 : f32
      %22 = vector.broadcast %cst_17 : f32 to vector<1x128xf32>
      %c0_18 = arith.constant 0 : index
      %c0_19 = arith.constant 0 : index
      %23 = vector.load %arg7[%c0_18, %c0_19] : memref<1x128xf32, #tpu.memory_space<vmem>>, vector<1x128xf32>
      tpu.vector_store %arg7[%c0_18, %c0_19], %22 {strides = array<i32>} : memref<1x128xf32, #tpu.memory_space<vmem>>, vector<1x128xf32>,
      %cst_20 = arith.constant 0.000000e+00 : f32
      %24 = vector.broadcast %cst_20 : f32 to vector<1x128xf32>
      %c0_21 = arith.constant 0 : index
      %c0_22 = arith.constant 0 : index
      %25 = vector.load %arg8[%c0_21, %c0_22] : memref<1x128xf32, #tpu.memory_space<vmem>>, vector<1x128xf32>
      tpu.vector_store %arg8[%c0_21, %c0_22], %24 {strides = array<i32>} : memref<1x128xf32, #tpu.memory_space<vmem>>, vector<1x128xf32>,
      %cst_23 = arith.constant 0.000000e+00 : f32
      %26 = vector.broadcast %cst_23 : f32 to vector<1x128xf32>
      %c0_24 = arith.constant 0 : index
      %c0_25 = arith.constant 0 : index
      %27 = vector.load %arg5[%c0_24, %c0_25] : memref<1x128xf32, #tpu.memory_space<vmem>>, vector<1x128xf32>
      tpu.vector_store %arg5[%c0_24, %c0_25], %26 {strides = array<i32>} : memref<1x128xf32, #tpu.memory_space<vmem>>, vector<1x128xf32>,
      %cst_26 = arith.constant 0.000000e+00 : f32
      %28 = vector.broadcast %cst_26 : f32 to vector<1x128xf32>
      %c0_27 = arith.constant 0 : index
      %c0_28 = arith.constant 0 : index
      %29 = vector.load %arg6[%c0_27, %c0_28] : memref<1x128xf32, #tpu.memory_space<vmem>>, vector<1x128xf32>
      tpu.vector_store %arg6[%c0_27, %c0_28], %28 {strides = array<i32>} : memref<1x128xf32, #tpu.memory_space<vmem>>, vector<1x128xf32>,
    } else {
    }
    %c0 = arith.constant 0 : index
    %c0_1 = arith.constant 0 : index
    %3 = vector.load %arg1[%c0, %c0_1] : memref<16x128xbf16, #tpu.memory_space<vmem>>, vector<16x128xbf16>
    %cst = arith.constant 0.000000e+00 : bf16
    %4 = vector.broadcast %cst : bf16 to vector<16x128xbf16>
    %5 = arith.maximumf %3, %4 : vector<16x128xbf16>
    %c0_2 = arith.constant 0 : index
    %c0_3 = arith.constant 0 : index
    %6 = vector.load %arg2[%c0_2, %c0_3] : memref<128x128xbf16, #tpu.memory_space<vmem>>, vector<128x128xbf16>
    %cst_4 = arith.constant dense<0.000000e+00> : vector<16x128xf32>
    %7 = tpu.matmul %5, %6, %cst_4 {dimension_numbers = #tpu.dot_dimension_numbers<[1], [0], [0], [1], [0, 0, 1, 1], [], []>} : vector<16x128xbf16>, vector<128x128xbf16>, vector<16x128xf32> -> vector<16x128xf32>
    %c0_5 = arith.constant 0 : index
    %c0_6 = arith.constant 0 : index
    %8 = vector.load %arg7[%c0_5, %c0_6] : memref<1x128xf32, #tpu.memory_space<vmem>>, vector<1x128xf32>
    %cst_7 = arith.constant dense<0.000000e+00> : vector<128xf32>
    %9 = vector.multi_reduction <add>, %7, %cst_7 [0] : vector<16x128xf32> to vector<128xf32>
    %10 = vector.shape_cast %9 : vector<128xf32> to vector<1x128xf32>
    %11 = arith.addf %8, %10 : vector<1x128xf32>
    %c0_8 = arith.constant 0 : index
    %c0_9 = arith.constant 0 : index
    %12 = vector.load %arg7[%c0_8, %c0_9] : memref<1x128xf32, #tpu.memory_space<vmem>>, vector<1x128xf32>
    tpu.vector_store %arg7[%c0_8, %c0_9], %11 {strides = array<i32>} : memref<1x128xf32, #tpu.memory_space<vmem>>, vector<1x128xf32>,
    %c0_10 = arith.constant 0 : index
    %c0_11 = arith.constant 0 : index
    %13 = vector.load %arg8[%c0_10, %c0_11] : memref<1x128xf32, #tpu.memory_space<vmem>>, vector<1x128xf32>
    %14 = arith.mulf %7, %7 : vector<16x128xf32>
    %cst_12 = arith.constant dense<0.000000e+00> : vector<128xf32>
    %15 = vector.multi_reduction <add>, %14, %cst_12 [0] : vector<16x128xf32> to vector<128xf32>
    %16 = vector.shape_cast %15 : vector<128xf32> to vector<1x128xf32>
    %17 = arith.addf %13, %16 : vector<1x128xf32>
    %c0_13 = arith.constant 0 : index
    %c0_14 = arith.constant 0 : index
    %18 = vector.load %arg8[%c0_13, %c0_14] : memref<1x128xf32, #tpu.memory_space<vmem>>, vector<1x128xf32>
    tpu.vector_store %arg8[%c0_13, %c0_14], %17 {strides = array<i32>} : memref<1x128xf32, #tpu.memory_space<vmem>>, vector<1x128xf32>,
    %c0_i32_15 = arith.constant 0 : i32
    %19 = arith.cmpi eq, %arg0, %c0_i32_15 : i32
    %20 = arith.extui %19 : i1 to i32
    %c0_i32_16 = arith.constant 0 : i32
    %21 = arith.cmpi ne, %20, %c0_i32_16 : i32
    scf.if %21 {
      %c0_17 = arith.constant 0 : index
      %c0_18 = arith.constant 0 : index
      %22 = vector.load %arg7[%c0_17, %c0_18] : memref<1x128xf32, #tpu.memory_space<vmem>>, vector<1x128xf32>
      %cst_19 = arith.constant 1.600000e+01 : f32
      %23 = vector.broadcast %cst_19 : f32 to vector<1x128xf32>
      %24 = arith.divf %22, %23 : vector<1x128xf32>
      %c0_20 = arith.constant 0 : index
      %c0_21 = arith.constant 0 : index
      %25 = vector.load %arg8[%c0_20, %c0_21] : memref<1x128xf32, #tpu.memory_space<vmem>>, vector<1x128xf32>
      %cst_22 = arith.constant 1.600000e+01 : f32
      %26 = vector.broadcast %cst_22 : f32 to vector<1x128xf32>
      %27 = arith.divf %25, %26 : vector<1x128xf32>
      %28 = arith.mulf %24, %24 : vector<1x128xf32>
      %29 = arith.subf %27, %28 : vector<1x128xf32>
      %cst_23 = arith.constant 0.000000e+00 : f32
      %30 = vector.broadcast %cst_23 : f32 to vector<1x128xf32>
      %31 = arith.maximumf %29, %30 : vector<1x128xf32>
      %cst_24 = arith.constant 9.99999974E-6 : f32
      %32 = vector.broadcast %cst_24 : f32 to vector<1x128xf32>
      %33 = arith.addf %31, %32 : vector<1x128xf32>
      %34 = math.rsqrt %33 : vector<1x128xf32>
      %c0_25 = arith.constant 0 : index
      %c0_26 = arith.constant 0 : index
      %35 = vector.load %arg3[%c0_25, %c0_26] : memref<1x128xf32, #tpu.memory_space<vmem>>, vector<1x128xf32>
      %36 = arith.mulf %35, %34 : vector<1x128xf32>
      %c0_27 = arith.constant 0 : index
      %c0_28 = arith.constant 0 : index
      %37 = vector.load %arg5[%c0_27, %c0_28] : memref<1x128xf32, #tpu.memory_space<vmem>>, vector<1x128xf32>
      tpu.vector_store %arg5[%c0_27, %c0_28], %36 {strides = array<i32>} : memref<1x128xf32, #tpu.memory_space<vmem>>, vector<1x128xf32>,
      %c0_29 = arith.constant 0 : index
      %c0_30 = arith.constant 0 : index
      %38 = vector.load %arg4[%c0_29, %c0_30] : memref<1x128xf32, #tpu.memory_space<vmem>>, vector<1x128xf32>
      %39 = arith.mulf %24, %36 : vector<1x128xf32>
      %40 = arith.subf %38, %39 : vector<1x128xf32>
      %c0_31 = arith.constant 0 : index
      %c0_32 = arith.constant 0 : index
      %41 = vector.load %arg6[%c0_31, %c0_32] : memref<1x128xf32, #tpu.memory_space<vmem>>, vector<1x128xf32>
      tpu.vector_store %arg6[%c0_31, %c0_32], %40 {strides = array<i32>} : memref<1x128xf32, #tpu.memory_space<vmem>>, vector<1x128xf32>,
    } else {
    }
    return
  }
  func.func @transform_0(%arg0: i32) -> (i32, i32) {
    %c0_i32 = arith.constant 0 : i32
    %c0_i32_0 = arith.constant 0 : i32
    return %arg0, %c0_i32 : i32, i32
  }
  func.func @transform_1(%arg0: i32) -> (i32, i32) {
    %c0_i32 = arith.constant 0 : i32
    %c0_i32_0 = arith.constant 0 : i32
    %c0_i32_1 = arith.constant 0 : i32
    return %c0_i32, %c0_i32_0 : i32, i32
  }
  func.func @transform_2(%arg0: i32) -> (i32, i32) {
    %c0_i32 = arith.constant 0 : i32
    %c0_i32_0 = arith.constant 0 : i32
    %c0_i32_1 = arith.constant 0 : i32
    return %c0_i32, %c0_i32_0 : i32, i32
  }
  func.func @transform_3(%arg0: i32) -> (i32, i32) {
    %c0_i32 = arith.constant 0 : i32
    %c0_i32_0 = arith.constant 0 : i32
    %c0_i32_1 = arith.constant 0 : i32
    return %c0_i32, %c0_i32_0 : i32, i32
  }
  func.func @transform_4(%arg0: i32) -> (i32, i32) {
    %c0_i32 = arith.constant 0 : i32
    %c0_i32_0 = arith.constant 0 : i32
    %c0_i32_1 = arith.constant 0 : i32
    return %c0_i32, %c0_i32_0 : i32, i32
  }
  func.func @transform_5(%arg0: i32) -> (i32, i32) {
    %c0_i32 = arith.constant 0 : i32
    %c0_i32_0 = arith.constant 0 : i32
    %c0_i32_1 = arith.constant 0 : i32
    return %c0_i32, %c0_i32_0 : i32, i32
  }
}

</mosaic_0001>

<llo_original>
// kernel: tpu_custom_call.1
$region0: #{tpu_custom_call.1}
  #allocation0 [shape = 'u32[]', space=smem, size = 0x4, offset = 0x4, fixed_abs, tag = 'smem constant byte address 0x4 - core index']
  #allocation1 [shape = 'u32[144,128]{1,0:T(1,128)}', space=vmem, size = 0x12000, scoped, tag = 'internal scratch']
  #allocation2 [shape = 'f32[1,128]{1,0:T(1,128)}', space=vmem, size = 0x200, scoped, tag = 'scratch operand']
  #allocation3 [shape = 'f32[1,128]{1,0:T(1,128)}', space=vmem, size = 0x200, scoped, tag = 'scratch operand']
  %s0 = inlined_call_operand.hbm [shape: bf16[16,128], index: 0, kind: input, shape index: {}]
  %s1 = inlined_call_operand.hbm [shape: bf16[128,128], index: 1, kind: input, shape index: {}]
  %s2 = inlined_call_operand.vmem [shape: f32[1,128], index: 2, kind: input, shape index: {}]
  %s3 = inlined_call_operand.vmem [shape: f32[1,128], index: 3, kind: input, shape index: {}]
  %s4 = inlined_call_operand.hbm [shape: f32[1,128], index: 4, kind: output, shape index: {0}]
  %s5 = inlined_call_operand.hbm [shape: f32[1,128], index: 5, kind: output, shape index: {1}]
  %6 = xla_tuple %s4, %s5
  %s7 = sld [smem:[#allocation0]]
  $region50: #{tpu_custom_call.1} parent=0
    _
  %s9 = ssub.s32 1, %s7
  %s10 = scalar_select 0, %s9, %s7
  $region1: #{tpu_custom_call.1} parent=0
    #allocation4 [shape = 'u8[4096]{0}', space=vmem, size = 0x1000, scoped, tag = 'input window, operand 0, single buffered']
    #allocation5 [shape = 's32[1]{0}', space=sflag, size = 0x4, scoped, tag = 'scoped memory for tpu_custom_call.1']
    #allocation6 [shape = 's32[1]{0}', space=sflag, size = 0x4, scoped, tag = 'scoped memory for tpu_custom_call.1']
    #allocation7 [shape = 'u8[32768]{0}', space=vmem, size = 0x8000, scoped, tag = 'input window, operand 1, single buffered']
    #allocation8 [shape = 's32[1]{0}', space=sflag, size = 0x4, scoped, tag = 'scoped memory for tpu_custom_call.1']
    #allocation9 [shape = 'u8[512]{0}', space=vmem, size = 0x400, scoped, tag = 'output window, operand 0, single buffered']
    #allocation10 [shape = 'u8[512]{0}', space=vmem, size = 0x400, scoped, tag = 'output window, operand 1, single buffered']
    #allocation11 [shape = 's32[1]{0}', space=sflag, size = 0x4, scoped, tag = 'scoped memory for tpu_custom_call.1']
    %11 = vsyncpa [#allocation5], 0
    %12 = vsyncpa [#allocation8], 0
    %13 = vsyncpa [#allocation6], 0
    %14 = vsyncpa [#allocation11], 0
    // Predicated region
    $region2: #{tpu_custom_call.1} parent=1 // pred_check
      _
    $region3: #{tpu_custom_call.1} parent=1 // pred_check_branch
      %16 = sbr.rel (0) target = $region5
    $region4: #{tpu_custom_call.1} parent=1 // pred_region
      %s18 = ssub.s32 128, 128
      %19 = vsyncadd [#allocation5], %s18
      %s20 = sshll.u32 [#allocation4], 4
      %s21 = int_to_ptr.vmem [resolvable:$true] %s20
      %26 = dma.hbm_to_vmem [thread:$0]  %s0, 128, %s21, [#allocation5], 64, 64, 4
    $region5: #{tpu_custom_call.1} parent=1 // pred_fallthru
      _
    // Predicated region
    $region6: #{tpu_custom_call.1} parent=1 // pred_check
      _
    $region7: #{tpu_custom_call.1} parent=1 // pred_check_branch
      %28 = sbr.rel (0) target = $region9
    $region8: #{tpu_custom_call.1} parent=1 // pred_region
      %s30 = ssub.s32 1024, 1024
      %31 = vsyncadd [#allocation8], %s30
      %s32 = sshll.u32 [#allocation7], 4
      %s33 = int_to_ptr.vmem [resolvable:$true] %s32
      %38 = dma.hbm_to_vmem [thread:$0]  %s1, 1024, %s33, [#allocation8], 64, 64, 4
    $region9: #{tpu_custom_call.1} parent=1 // pred_fallthru
      _
    // Predicated region
    $region10: #{tpu_custom_call.1} parent=1 // pred_check
      _
    $region11: #{tpu_custom_call.1} parent=1 // pred_check_branch
      %40 = sbr.rel (0) target = $region13
    $region12: #{tpu_custom_call.1} parent=1 // pred_region
      _
    $region13: #{tpu_custom_call.1} parent=1 // pred_fallthru
      _
    // Predicated region
    $region14: #{tpu_custom_call.1} parent=1 // pred_check
      _
    $region15: #{tpu_custom_call.1} parent=1 // pred_check_branch
      %42 = sbr.rel (0) target = $region17
    $region16: #{tpu_custom_call.1} parent=1 // pred_region
      _
    $region17: #{tpu_custom_call.1} parent=1 // pred_fallthru
      _
    // Predicated region
    $region18: #{tpu_custom_call.1} parent=1 // pred_check
      _
    $region19: #{tpu_custom_call.1} parent=1 // pred_check_branch
      %44 = sbr.rel (0) target = $region21
    $region20: #{tpu_custom_call.1} parent=1 // pred_region
      %45 = dma.done [#allocation5], 128
    $region21: #{tpu_custom_call.1} parent=1 // pred_fallthru
      _
    // Predicated region
    $region22: #{tpu_custom_call.1} parent=1 // pred_check
      _
    $region23: #{tpu_custom_call.1} parent=1 // pred_check_branch
      %47 = sbr.rel (0) target = $region25
    $region24: #{tpu_custom_call.1} parent=1 // pred_region
      %48 = dma.done [#allocation8], 1024
    $region25: #{tpu_custom_call.1} parent=1 // pred_fallthru
      _
    %p50 = scmp.eq.s32.totalorder 0, 0
    // Predicated region
    $region26: #{tpu_custom_call.1} parent=1 // pred_check
      %p51 = pneg %p50
    $region27: #{tpu_custom_call.1} parent=1 // pred_check_branch
      %53 = sbr.rel (%p51) target = $region29
    $region28: #{tpu_custom_call.1} parent=1 // pred_region
      %54 = vst [vmem:[#allocation2] sm:$0x1] 0.0
      %55 = vst [vmem:[#allocation3] sm:$0x1] 0.0
      %56 = vst [vmem:[#allocation9] sm:$0x1] 0.0
      %57 = vst [vmem:[#allocation10] sm:$0x1] 0.0
    $region29: #{tpu_custom_call.1} parent=1 // pred_fallthru
      _
    %v58 = vld [vmem:[#allocation4] sm:$0xf]
    %v59 = vld [vmem:[#allocation4 + $0x4] sm:$0xf]
    %v60 = vmax.bf16 %v58, 0
    %v61 = vmax.bf16 %v59, 0
    %v62 = vld [vmem:[#allocation7] sm:$0xf]
    %v63 = vld [vmem:[#allocation7 + $0x4] sm:$0xf]
    %v64 = vld [vmem:[#allocation7 + $0x8] sm:$0xf]
    %v65 = vld [vmem:[#allocation7 + $0xc] sm:$0xf]
    %v66 = vld [vmem:[#allocation7 + $0x10] sm:$0xf]
    %v67 = vld [vmem:[#allocation7 + $0x14] sm:$0xf]
    %v68 = vld [vmem:[#allocation7 + $0x18] sm:$0xf]
    %v69 = vld [vmem:[#allocation7 + $0x1c] sm:$0xf]
    %v70 = vld [vmem:[#allocation7 + $0x20] sm:$0xf]
    %v71 = vld [vmem:[#allocation7 + $0x24] sm:$0xf]
    %v72 = vld [vmem:[#allocation7 + $0x28] sm:$0xf]
    %v73 = vld [vmem:[#allocation7 + $0x2c] sm:$0xf]
    %v74 = vld [vmem:[#allocation7 + $0x30] sm:$0xf]
    %v75 = vld [vmem:[#allocation7 + $0x34] sm:$0xf]
    %v76 = vld [vmem:[#allocation7 + $0x38] sm:$0xf]
    %v77 = vld [vmem:[#allocation7 + $0x3c] sm:$0xf]
    %v80 = vunpack.c.l.b16 %v60
    %v81 = vunpack.c.l.b16 %v61
    %v82 = vpack.c.b16 %v81, %v80
    %v100 = vunpack.c.l.b16 %v62
    %v101 = vunpack.c.l.b16 %v63
    %v102 = vunpack.c.l.b16 %v64
    %v103 = vunpack.c.l.b16 %v65
    %v104 = vunpack.c.l.b16 %v66
    %v105 = vunpack.c.l.b16 %v67
    %v106 = vunpack.c.l.b16 %v68
    %v107 = vunpack.c.l.b16 %v69
    %v108 = vunpack.c.l.b16 %v70
    %v109 = vunpack.c.l.b16 %v71
    %v110 = vunpack.c.l.b16 %v72
    %v111 = vunpack.c.l.b16 %v73
    %v112 = vunpack.c.l.b16 %v74
    %v113 = vunpack.c.l.b16 %v75
    %v114 = vunpack.c.l.b16 %v76
    %v115 = vunpack.c.l.b16 %v77
    %v116 = vpack.c.b16 %v101, %v100
    %v117 = vpack.c.b16 %v103, %v102
    %v118 = vpack.c.b16 %v105, %v104
    %v119 = vpack.c.b16 %v107, %v106
    %v120 = vpack.c.b16 %v109, %v108
    %v121 = vpack.c.b16 %v111, %v110
    %v122 = vpack.c.b16 %v113, %v112
    %v123 = vpack.c.b16 %v115, %v114
    %132 = vmatprep.subr.bf16.mxu0 0
    %133 = vmatpush1.bf16.msra.mxu0 %v116
    %134 = vmatprep.subr.bf16.mxu0 0
    %135 = vmatpush1.bf16.msra.mxu0 %v117
    %136 = vmatprep.subr.bf16.mxu0 0
    %137 = vmatpush1.bf16.msra.mxu0 %v118
    %138 = vmatprep.subr.bf16.mxu0 0
    %139 = vmatpush1.bf16.msra.mxu0 %v119
    %140 = vmatprep.subr.bf16.mxu0 0
    %141 = vmatpush1.bf16.msra.mxu0 %v120
    %142 = vmatprep.subr.bf16.mxu0 0
    %143 = vmatpush1.bf16.msra.mxu0 %v121
    %144 = vmatprep.subr.bf16.mxu0 0
    %145 = vmatpush1.bf16.msra.mxu0 %v122
    %146 = vmatprep.subr.bf16.mxu0 0
    %147 = vmatpush1.bf16.msra.mxu0 %v123
    %148 = vmatprep.subr.bf16.mxu0 0
    %149 = vmatpush1.bf16.msra.mxu0 0
    %150 = vmatprep.subr.bf16.mxu0 0
    %151 = vmatpush1.bf16.msra.mxu0 0
    %152 = vmatprep.subr.bf16.mxu0 0
    %153 = vmatpush1.bf16.msra.mxu0 0
    %154 = vmatprep.subr.bf16.mxu0 0
    %155 = vmatpush1.bf16.msra.mxu0 0
    %156 = vmatprep.subr.bf16.mxu0 0
    %157 = vmatpush1.bf16.msra.mxu0 0
    %158 = vmatprep.subr.bf16.mxu0 0
    %159 = vmatpush1.bf16.msra.mxu0 0
    %160 = vmatprep.subr.bf16.mxu0 0
    %161 = vmatpush1.bf16.msra.mxu0 0
    %162 = vmatprep.subr.bf16.mxu0 0
    %163 = vmatpush1.bf16.msra.mxu0 0
    %164 = vmatprep.mubr.bf16.mxu0 0
    %165 = vmatmul.mubr.bf16.gmra.mrb[0].mxu0 %v82
    %v166 = vpop.f32.mrb[0].mxu0
    %v167 = vadd.f32 0.0, %v166
    %v168 = vpop.f32.mrb[0].mxu0
    %v169 = vpop.f32.mrb[0].mxu0
    %v170 = vadd.f32 0.0, %v169
    %v171 = vpop.f32.mrb[0].mxu0
    %172 = vdwg.mxu0
    %v173 = vld [vmem:[#allocation2] sm:$0x1]
    %v174 = vadd.f32 %v167, %v170
    %v175 = vrot.slane %v174, 4
    %v176 = vadd.f32 %v174, %v175
    %v177 = vrot.slane %v176, 2
    %v178 = vadd.f32 %v176, %v177
    %v179 = vrot.slane %v178, 1
    %v180 = vadd.f32 %v178, %v179
    %v181 = vadd.f32 %v173, %v180
    %182 = vst [vmem:[#allocation2] sm:$0x1] %v181
    %v183 = vld [vmem:[#allocation3] sm:$0x1]
    %v184 = vmul.f32 %v167, %v167
    %v185 = vmul.f32 %v170, %v170
    %v186 = vadd.f32 %v184, %v185
    %v187 = vrot.slane %v186, 4
    %v188 = vadd.f32 %v186, %v187
    %v189 = vrot.slane %v188, 2
    %v190 = vadd.f32 %v188, %v189
    %v191 = vrot.slane %v190, 1
    %v192 = vadd.f32 %v190, %v191
    %v193 = vadd.f32 %v183, %v192
    %194 = vst [vmem:[#allocation3] sm:$0x1] %v193
    // Predicated region
    $region30: #{tpu_custom_call.1} parent=1 // pred_check
      %p195 = pneg %p50
    $region31: #{tpu_custom_call.1} parent=1 // pred_check_branch
      %197 = sbr.rel (%p195) target = $region33
    $region32: #{tpu_custom_call.1} parent=1 // pred_region
      %v198 = vld [vmem:[#allocation2] sm:$0x1]
      %v199 = vrcp.pop 16.0
      %v200 = vmul.f32 %v198, %v199
      %v201 = vld [vmem:[#allocation3] sm:$0x1]
      %v202 = vmul.f32 %v201, %v199
      %v203 = vmul.f32 %v200, %v200
      %v204 = vsub.f32 %v202, %v203
      %v205 = vmax.f32 %v204, 0.0
      %v206 = vadd.f32 %v205, 1e-05
      %v207 = vrsqrt.pop %v206
      %v208 = vld [vmem:[%s2] sm:$0x1]
      %v209 = vmul.f32 %v208, %v207
      %210 = vst [vmem:[#allocation9] sm:$0x1] %v209
      %v211 = vld [vmem:[%s3] sm:$0x1]
      %v212 = vmul.f32 %v200, %v209
      %v213 = vsub.f32 %v211, %v212
      %214 = vst [vmem:[#allocation10] sm:$0x1] %v213
    $region33: #{tpu_custom_call.1} parent=1 // pred_fallthru
      _
    // Predicated region
    $region34: #{tpu_custom_call.1} parent=1 // pred_check
      _
    $region35: #{tpu_custom_call.1} parent=1 // pred_check_branch
      %216 = sbr.rel (0) target = $region37
    $region36: #{tpu_custom_call.1} parent=1 // pred_region
      %s218 = ssub.s32 16, 16
      %219 = vsyncadd [#allocation6], %s218
      %s221 = sshll.u32 [#allocation9], 4
      %s222 = int_to_ptr.vmem [resolvable:$true] %s221
      %224 = dma.vmem_to_hbm [thread:$0]  %s222, 16, %s4, [#allocation6]
    $region37: #{tpu_custom_call.1} parent=1 // pred_fallthru
      _
    // Predicated region
    $region38: #{tpu_custom_call.1} parent=1 // pred_check
      _
    $region39: #{tpu_custom_call.1} parent=1 // pred_check_branch
      %226 = sbr.rel (0) target = $region41
    $region40: #{tpu_custom_call.1} parent=1 // pred_region
      %s228 = ssub.s32 16, 16
      %229 = vsyncadd [#allocation11], %s228
      %s231 = sshll.u32 [#allocation10], 4
      %s232 = int_to_ptr.vmem [resolvable:$true] %s231
      %234 = dma.vmem_to_hbm [thread:$0]  %s232, 16, %s5, [#allocation11]
    $region41: #{tpu_custom_call.1} parent=1 // pred_fallthru
      _
    // Predicated region
    $region42: #{tpu_custom_call.1} parent=1 // pred_check
      _
    $region43: #{tpu_custom_call.1} parent=1 // pred_check_branch
      %236 = sbr.rel (0) target = $region45
    $region44: #{tpu_custom_call.1} parent=1 // pred_region
      %237 = dma.done [#allocation6], 16
    $region45: #{tpu_custom_call.1} parent=1 // pred_fallthru
      _
    // Predicated region
    $region46: #{tpu_custom_call.1} parent=1 // pred_check
      _
    $region47: #{tpu_custom_call.1} parent=1 // pred_check_branch
      %239 = sbr.rel (0) target = $region49
    $region48: #{tpu_custom_call.1} parent=1 // pred_region
      %240 = dma.done [#allocation11], 16
    $region49: #{tpu_custom_call.1} parent=1 // pred_fallthru
      _
    %241 = vsyncpa [#allocation5], 1
    %242 = vsyncpa [#allocation8], 1
    %243 = vsyncpa [#allocation6], 1
    %244 = vsyncpa [#allocation11], 1

</llo_original>
